<compile_context>
chip_gen: v5e
topology: v5e:2x2
jax: 0.10.0
libtpu: 0.0.40
codegen_flags: <defaults>
</compile_context>

<pallas_src>
import functools

import jax
import jax.numpy as jnp
from jax import lax
from jax.experimental import pallas as pl
from jax.experimental.pallas import tpu as pltpu


_NUM_CORES = 2          # v7x has 2 TensorCores / chip; extra axis is harmless on 1-TC chips.
_MAX_TILE_ROWS = 1024   # gather is per-row-DMA bound; bigger tiles only add VMEM / queue depth.


def _vmem_capacity_bytes():
    try:
        return int(pltpu.get_tpu_info().vmem_capacity_bytes)
    except Exception:           # e.g. interpret mode / CPU AOT — be conservative (v7x size).
        return 64 << 20


def _pick_tile_rows(rows_per_core, dpad, vmem_cap_bytes):
    """Rows per tile from a byte budget: 2 slots * 6 streams * tb * dpad * 4B."""
    budget = min(vmem_cap_bytes // 3, 48 << 20)
    tb = budget // (2 * 6 * dpad * 4)
    tb = min(tb, _MAX_TILE_ROWS)
    tb = max(8, (tb // 8) * 8)
    need = ((max(rows_per_core, 1) + 7) // 8) * 8
    return min(tb, need)


# ---------------------------------------------------------------------------
# Fused kernel (per (core, batch-tile) grid point):
#   gather 6*tb rows (hp, rp, tp, hn, rn, tn) from HBM via per-row DMAs,
#   L2-normalize the entity rows (rsqrt * mul), L1 score, hinge, accumulate.
# ---------------------------------------------------------------------------
def _transe_gather_loss_kernel(
        # scalar-prefetch (SMEM) triple index columns, each (bpad,) int32
        hp_idx, rp_idx, tp_idx, hn_idx, rn_idx, tn_idx,
        # HBM tables (memory_space=pl.ANY)
        ent_hbm, rel_hbm,
        # output: (1, 1, 1) per-core partial loss block
        loss_ref,
        # scratch
        buf,        # VMEM (2, 6, tb, dpad) f32 — double-buffered gather landing zone
        sem,        # DMA semaphores, one per slot
        acc,        # VMEM (tb, 1) f32 — per-row hinge accumulator
        *, margin, batch):
    c = pl.program_id(0)
    j = pl.program_id(1)
    nj = pl.num_programs(1)
    tb = buf.shape[2]
    tile = c * nj + j               # global batch-tile index -> row base tile*tb

    def start_fetch(tile_idx, slot):
        base = tile_idx * tb

        def fetch_row(row, carry):
            g = base + row
            pltpu.make_async_copy(ent_hbm.at[hp_idx[g]], buf.at[slot, 0, row], sem.at[slot]).start()
            pltpu.make_async_copy(rel_hbm.at[rp_idx[g]], buf.at[slot, 1, row], sem.at[slot]).start()
            pltpu.make_async_copy(ent_hbm.at[tp_idx[g]], buf.at[slot, 2, row], sem.at[slot]).start()
            pltpu.make_async_copy(ent_hbm.at[hn_idx[g]], buf.at[slot, 3, row], sem.at[slot]).start()
            pltpu.make_async_copy(rel_hbm.at[rn_idx[g]], buf.at[slot, 4, row], sem.at[slot]).start()
            pltpu.make_async_copy(ent_hbm.at[tn_idx[g]], buf.at[slot, 5, row], sem.at[slot]).start()
            return carry

        lax.fori_loop(0, tb, fetch_row, 0)

    @pl.when(j == 0)
    def _():
        acc[...] = jnp.zeros_like(acc)
        start_fetch(tile, 0)        # prime slot 0 for this core's first tile

    slot = j % 2

    # All 6*tb row copies for this tile signal sem[slot]; a single wait on the
    # full slot (byte-counted) covers them.
    pltpu.make_async_copy(buf.at[slot], buf.at[slot], sem.at[slot]).wait()

    # Prefetch the next tile into the other slot; the DMA transfer overlaps the
    # compute below (descriptor issue itself is scalar-path work).
    @pl.when(j + 1 < nj)
    def _():
        start_fetch(tile + 1, 1 - slot)

    hp = buf[slot, 0]
    rp = buf[slot, 1]
    tp = buf[slot, 2]
    hn = buf[slot, 3]
    rn = buf[slot, 4]
    tn = buf[slot, 5]

    def l1_score(h, r, t):
        # Row-wise L2 normalization of the gathered entity rows.
        # TODO(synk): PyTorch's in-place weight renorm has no epsilon guard; we
        # match those semantics (an all-zero row would produce Inf/NaN).
        h = h * lax.rsqrt(jnp.sum(h * h, axis=1, keepdims=True))
        t = t * lax.rsqrt(jnp.sum(t * t, axis=1, keepdims=True))
        return jnp.sum(jnp.abs(h + r - t), axis=1, keepdims=True)      # (tb, 1)

    pos = l1_score(hp, rp, tp)
    neg = l1_score(hn, rn, tn)
    hinge = jnp.maximum(pos - neg + margin, 0.0)                       # (tb, 1)

    # Mask rows that are batch padding (their indices were padded with 0).
    row = tile * tb + lax.broadcasted_iota(jnp.int32, (tb, 1), 0)
    hinge = jnp.where(row < batch, hinge, 0.0)

    acc[...] += hinge             # deferred reduce: pure VPU add per step

    @pl.when(j == nj - 1)
    def _():
        loss_ref[...] = jnp.reshape(jnp.sum(acc[...]), (1, 1, 1))      # per-core partial sum


# ---------------------------------------------------------------------------
# Wrapper: lane-dense padding of the tables, batch padding of the index
# columns, tile sizing, and the pallas_call.  No jnp.take anywhere.
# ---------------------------------------------------------------------------
def transe_forward(entity_emb, relation_emb, batch_positives, batch_negatives,
                   margin, *, ncores=_NUM_CORES):
    n_ent, d = entity_emb.shape
    assert relation_emb.shape[1] == d
    b = int(batch_positives.shape[0])

    dpad = ((d + 127) // 128) * 128
    ent = jnp.pad(entity_emb.astype(jnp.float32), ((0, 0), (0, dpad - d)))
    rel = jnp.pad(relation_emb.astype(jnp.float32), ((0, 0), (0, dpad - d)))

    vmem_cap = _vmem_capacity_bytes()
    rows_per_core = pl.cdiv(b, ncores)
    tb = _pick_tile_rows(rows_per_core, dpad, vmem_cap)
    ntiles = pl.cdiv(rows_per_core, tb)
    bpad = ncores * ntiles * tb

    def idx_col(triples, col):
        v = triples[:, col].astype(jnp.int32)
        return jnp.pad(v, (0, bpad - b))      # pad with valid index 0; masked in-kernel

    idx_args = (idx_col(batch_positives, 0), idx_col(batch_positives, 1),
                idx_col(batch_positives, 2), idx_col(batch_negatives, 0),
                idx_col(batch_negatives, 1), idx_col(batch_negatives, 2))

    buf_bytes = 2 * 6 * tb * dpad * 4
    vmem_limit = int(min(max(buf_bytes + (16 << 20), 64 << 20), (vmem_cap * 3) // 4))
    vmem_limit = max(vmem_limit, buf_bytes + (4 << 20))

    kernel = functools.partial(_transe_gather_loss_kernel,
                               margin=float(margin), batch=b)

    partials = pl.pallas_call(
        kernel,
        out_shape=jax.ShapeDtypeStruct((ncores, 1, 1), jnp.float32),
        grid_spec=pltpu.PrefetchScalarGridSpec(
            num_scalar_prefetch=6,
            grid=(ncores, ntiles),
            in_specs=[pl.BlockSpec(memory_space=pl.ANY),    # entity table stays in HBM
                      pl.BlockSpec(memory_space=pl.ANY)],   # relation table stays in HBM
            out_specs=pl.BlockSpec((1, 1, 1), lambda c, j, *_: (c, 0, 0)),
            scratch_shapes=[
                pltpu.VMEM((2, 6, tb, dpad), jnp.float32),
                pltpu.SemaphoreType.DMA((2,)),
                pltpu.VMEM((tb, 1), jnp.float32),
            ],
        ),
        compiler_params=pltpu.CompilerParams(
            dimension_semantics=("parallel", "arbitrary"),
            vmem_limit_bytes=vmem_limit),
    )(*idx_args, ent, rel)

    return jnp.sum(partials) / b


# Pure-JAX reference for a sanity check (mirrors TransE.forward exactly).
def transe_forward_ref(entity_emb, relation_emb, pos, neg, margin):
    ent = entity_emb / jnp.linalg.norm(entity_emb, axis=1, keepdims=True)

    def score(triples):
        h = ent[triples[:, 0]]
        r = relation_emb[triples[:, 1]]
        t = ent[triples[:, 2]]
        return jnp.sum(jnp.abs(h + r - t), axis=1)

    ps, ns = score(pos), score(neg)
    return jnp.mean(jnp.maximum(ps - ns + margin, 0.0))


if __name__ == "__main__":
    num_entities = 16
    num_relations = 4
    embedding_dim = 32
    batch = 8
    margin_loss = 1.0

    key = jax.random.PRNGKey(0)
    k_ent, k_rel, kh, kr, kt, khn, krn, ktn = jax.random.split(key, 8)

    # Deterministic init matching TransE._initialize():
    #   uniform(-6/sqrt(d), +6/sqrt(d)) for both tables,
    #   relation table L2-normalized per row at init time.
    bound = 6.0 / jnp.sqrt(jnp.float32(embedding_dim))
    entity_emb = jax.random.uniform(
        k_ent, (num_entities, embedding_dim), jnp.float32, -bound, bound)
    relation_emb = jax.random.uniform(
        k_rel, (num_relations, embedding_dim), jnp.float32, -bound, bound)
    relation_emb = relation_emb / jnp.linalg.norm(
        relation_emb, axis=1, keepdims=True)

    # Synthetic (head, relation, tail) triples, int32 indices.
    pos_triples = jnp.stack(
        [jax.random.randint(kh, (batch,), 0, num_entities),
         jax.random.randint(kr, (batch,), 0, num_relations),
         jax.random.randint(kt, (batch,), 0, num_entities)], axis=1)
    neg_triples = jnp.stack(
        [jax.random.randint(khn, (batch,), 0, num_entities),
         jax.random.randint(krn, (batch,), 0, num_relations),
         jax.random.randint(ktn, (batch,), 0, num_entities)], axis=1)

    loss = transe_forward(entity_emb, relation_emb, pos_triples, neg_triples,
                          margin_loss)
    loss = jax.block_until_ready(loss)

    ref = transe_forward_ref(entity_emb, relation_emb, pos_triples,
                             neg_triples, margin_loss)
    assert jnp.allclose(loss, ref, atol=1e-4, rtol=1e-4), (loss, ref)

    print("KERNEL_OK")
</pallas_src>

<mosaic_0001>
module attributes {stable_mosaic.version = 11 : i64} {
  func.func @_transe_gather_loss_kernel(%arg0: i32, %arg1: i32, %arg2: memref<16xi32, #tpu.memory_space<smem>>, %arg3: memref<16xi32, #tpu.memory_space<smem>>, %arg4: memref<16xi32, #tpu.memory_space<smem>>, %arg5: memref<16xi32, #tpu.memory_space<smem>>, %arg6: memref<16xi32, #tpu.memory_space<smem>>, %arg7: memref<16xi32, #tpu.memory_space<smem>>, %arg8: memref<16x128xf32, #tpu.memory_space<any>>, %arg9: memref<4x128xf32, #tpu.memory_space<any>>, %arg10: memref<1x1x1xf32, #tpu.memory_space<vmem>>, %arg11: memref<2x6x8x128xf32, #tpu.memory_space<vmem>>, %arg12: memref<2x!tpu.dma_semaphore, #tpu.memory_space<semaphore_mem>>, %arg13: memref<8x1xf32, #tpu.memory_space<vmem>>) attributes {dimension_semantics = [#tpu.dimension_semantics<parallel>, #tpu.dimension_semantics<arbitrary>], iteration_bounds = array<i64: 2, 1>, scalar_prefetch = 6 : i64, scratch_operands = 3 : i64, tpu.core_type = #tpu.core_type<tc>, window_params = [{}, {}, {transform_indices = @transform_2, window_bounds = array<i64: 1, 1, 1>}]} {
    %c1_i32 = arith.constant 1 : i32
    %0 = arith.muli %arg0, %c1_i32 : i32
    %1 = arith.addi %0, %arg1 : i32
    %c0_i32 = arith.constant 0 : i32
    %2 = arith.cmpi eq, %arg1, %c0_i32 : i32
    %3 = arith.extui %2 : i1 to i32
    %c0_i32_0 = arith.constant 0 : i32
    %4 = arith.cmpi ne, %3, %c0_i32_0 : i32
    scf.if %4 {
      %cst_42 = arith.constant 0.000000e+00 : f32
      %96 = vector.broadcast %cst_42 : f32 to vector<8x1xf32>
      %c0_43 = arith.constant 0 : index
      %c0_44 = arith.constant 0 : index
      %97 = vector.load %arg13[%c0_43, %c0_44] : memref<8x1xf32, #tpu.memory_space<vmem>>, vector<8x1xf32>
      tpu.vector_store %arg13[%c0_43, %c0_44], %96 {strides = array<i32>} : memref<8x1xf32, #tpu.memory_space<vmem>>, vector<8x1xf32>,
      %c8_i32_45 = arith.constant 8 : i32
      %98 = arith.muli %1, %c8_i32_45 : i32
      %c0_i32_46 = arith.constant 0 : i32
      %c8_i32_47 = arith.constant 8 : i32
      %99 = arith.addi %c0_i32_46, %c8_i32_47 : i32
      %c1_i32_48 = arith.constant 1 : i32
      scf.for %arg14 = %c0_i32_46 to %99 step %c1_i32_48  : i32 {
        %100 = arith.addi %98, %arg14 : i32
        %101 = arith.index_cast %100 : i32 to index
        %102 = memref.load %arg2[%101] : memref<16xi32, #tpu.memory_space<smem>>
        %c0_i32_50 = arith.constant 0 : i32
        %c0_i32_51 = arith.constant 0 : i32
        %c0_i32_52 = arith.constant 0 : i32
        %c0_i32_53 = arith.constant 0 : i32
        %103 = tpu.memref_slice %arg8[%102, %c0_i32_53] : memref<16x128xf32, #tpu.memory_space<any>> -> memref<1x128xf32, #tpu.memory_space<any>>
        %104 = tpu.memref_squeeze %103 : memref<1x128xf32, #tpu.memory_space<any>> -> memref<128xf32, #tpu.memory_space<any>>
        %c0_i32_54 = arith.constant 0 : i32
        %105 = tpu.memref_slice %arg11[%c0_i32_50, %c0_i32_51, %arg14, %c0_i32_54] : memref<2x6x8x128xf32, #tpu.memory_space<vmem>> -> memref<1x1x1x128xf32, #tpu.memory_space<vmem>>
        %106 = tpu.memref_squeeze %105 : memref<1x1x1x128xf32, #tpu.memory_space<vmem>> -> memref<128xf32, #tpu.memory_space<vmem>>
        %107 = tpu.memref_slice %arg12[%c0_i32_52] : memref<2x!tpu.dma_semaphore, #tpu.memory_space<semaphore_mem>> -> memref<1x!tpu.dma_semaphore, #tpu.memory_space<semaphore_mem>>
        %108 = tpu.memref_squeeze %107 : memref<1x!tpu.dma_semaphore, #tpu.memory_space<semaphore_mem>> -> memref<!tpu.dma_semaphore, #tpu.memory_space<semaphore_mem>>
        tpu.enqueue_dma source(%104 : memref<128xf32, #tpu.memory_space<any>>) target(%106 : memref<128xf32, #tpu.memory_space<vmem>>) target_semaphore(%108 : memref<!tpu.dma_semaphore, #tpu.memory_space<semaphore_mem>>)
        %109 = arith.index_cast %100 : i32 to index
        %110 = memref.load %arg3[%109] : memref<16xi32, #tpu.memory_space<smem>>
        %c0_i32_55 = arith.constant 0 : i32
        %c1_i32_56 = arith.constant 1 : i32
        %c0_i32_57 = arith.constant 0 : i32
        %c0_i32_58 = arith.constant 0 : i32
        %111 = tpu.memref_slice %arg9[%110, %c0_i32_58] : memref<4x128xf32, #tpu.memory_space<any>> -> memref<1x128xf32, #tpu.memory_space<any>>
        %112 = tpu.memref_squeeze %111 : memref<1x128xf32, #tpu.memory_space<any>> -> memref<128xf32, #tpu.memory_space<any>>
        %c0_i32_59 = arith.constant 0 : i32
        %113 = tpu.memref_slice %arg11[%c0_i32_55, %c1_i32_56, %arg14, %c0_i32_59] : memref<2x6x8x128xf32, #tpu.memory_space<vmem>> -> memref<1x1x1x128xf32, #tpu.memory_space<vmem>>
        %114 = tpu.memref_squeeze %113 : memref<1x1x1x128xf32, #tpu.memory_space<vmem>> -> memref<128xf32, #tpu.memory_space<vmem>>
        %115 = tpu.memref_slice %arg12[%c0_i32_57] : memref<2x!tpu.dma_semaphore, #tpu.memory_space<semaphore_mem>> -> memref<1x!tpu.dma_semaphore, #tpu.memory_space<semaphore_mem>>
        %116 = tpu.memref_squeeze %115 : memref<1x!tpu.dma_semaphore, #tpu.memory_space<semaphore_mem>> -> memref<!tpu.dma_semaphore, #tpu.memory_space<semaphore_mem>>
        tpu.enqueue_dma source(%112 : memref<128xf32, #tpu.memory_space<any>>) target(%114 : memref<128xf32, #tpu.memory_space<vmem>>) target_semaphore(%116 : memref<!tpu.dma_semaphore, #tpu.memory_space<semaphore_mem>>)
        %117 = arith.index_cast %100 : i32 to index
        %118 = memref.load %arg4[%117] : memref<16xi32, #tpu.memory_space<smem>>
        %c0_i32_60 = arith.constant 0 : i32
        %c2_i32_61 = arith.constant 2 : i32
        %c0_i32_62 = arith.constant 0 : i32
        %c0_i32_63 = arith.constant 0 : i32
        %119 = tpu.memref_slice %arg8[%118, %c0_i32_63] : memref<16x128xf32, #tpu.memory_space<any>> -> memref<1x128xf32, #tpu.memory_space<any>>
        %120 = tpu.memref_squeeze %119 : memref<1x128xf32, #tpu.memory_space<any>> -> memref<128xf32, #tpu.memory_space<any>>
        %c0_i32_64 = arith.constant 0 : i32
        %121 = tpu.memref_slice %arg11[%c0_i32_60, %c2_i32_61, %arg14, %c0_i32_64] : memref<2x6x8x128xf32, #tpu.memory_space<vmem>> -> memref<1x1x1x128xf32, #tpu.memory_space<vmem>>
        %122 = tpu.memref_squeeze %121 : memref<1x1x1x128xf32, #tpu.memory_space<vmem>> -> memref<128xf32, #tpu.memory_space<vmem>>
        %123 = tpu.memref_slice %arg12[%c0_i32_62] : memref<2x!tpu.dma_semaphore, #tpu.memory_space<semaphore_mem>> -> memref<1x!tpu.dma_semaphore, #tpu.memory_space<semaphore_mem>>
        %124 = tpu.memref_squeeze %123 : memref<1x!tpu.dma_semaphore, #tpu.memory_space<semaphore_mem>> -> memref<!tpu.dma_semaphore, #tpu.memory_space<semaphore_mem>>
        tpu.enqueue_dma source(%120 : memref<128xf32, #tpu.memory_space<any>>) target(%122 : memref<128xf32, #tpu.memory_space<vmem>>) target_semaphore(%124 : memref<!tpu.dma_semaphore, #tpu.memory_space<semaphore_mem>>)
        %125 = arith.index_cast %100 : i32 to index
        %126 = memref.load %arg5[%125] : memref<16xi32, #tpu.memory_space<smem>>
        %c0_i32_65 = arith.constant 0 : i32
        %c3_i32 = arith.constant 3 : i32
        %c0_i32_66 = arith.constant 0 : i32
        %c0_i32_67 = arith.constant 0 : i32
        %127 = tpu.memref_slice %arg8[%126, %c0_i32_67] : memref<16x128xf32, #tpu.memory_space<any>> -> memref<1x128xf32, #tpu.memory_space<any>>
        %128 = tpu.memref_squeeze %127 : memref<1x128xf32, #tpu.memory_space<any>> -> memref<128xf32, #tpu.memory_space<any>>
        %c0_i32_68 = arith.constant 0 : i32
        %129 = tpu.memref_slice %arg11[%c0_i32_65, %c3_i32, %arg14, %c0_i32_68] : memref<2x6x8x128xf32, #tpu.memory_space<vmem>> -> memref<1x1x1x128xf32, #tpu.memory_space<vmem>>
        %130 = tpu.memref_squeeze %129 : memref<1x1x1x128xf32, #tpu.memory_space<vmem>> -> memref<128xf32, #tpu.memory_space<vmem>>
        %131 = tpu.memref_slice %arg12[%c0_i32_66] : memref<2x!tpu.dma_semaphore, #tpu.memory_space<semaphore_mem>> -> memref<1x!tpu.dma_semaphore, #tpu.memory_space<semaphore_mem>>
        %132 = tpu.memref_squeeze %131 : memref<1x!tpu.dma_semaphore, #tpu.memory_space<semaphore_mem>> -> memref<!tpu.dma_semaphore, #tpu.memory_space<semaphore_mem>>
        tpu.enqueue_dma source(%128 : memref<128xf32, #tpu.memory_space<any>>) target(%130 : memref<128xf32, #tpu.memory_space<vmem>>) target_semaphore(%132 : memref<!tpu.dma_semaphore, #tpu.memory_space<semaphore_mem>>)
        %133 = arith.index_cast %100 : i32 to index
        %134 = memref.load %arg6[%133] : memref<16xi32, #tpu.memory_space<smem>>
        %c0_i32_69 = arith.constant 0 : i32
        %c4_i32 = arith.constant 4 : i32
        %c0_i32_70 = arith.constant 0 : i32
        %c0_i32_71 = arith.constant 0 : i32
        %135 = tpu.memref_slice %arg9[%134, %c0_i32_71] : memref<4x128xf32, #tpu.memory_space<any>> -> memref<1x128xf32, #tpu.memory_space<any>>
        %136 = tpu.memref_squeeze %135 : memref<1x128xf32, #tpu.memory_space<any>> -> memref<128xf32, #tpu.memory_space<any>>
        %c0_i32_72 = arith.constant 0 : i32
        %137 = tpu.memref_slice %arg11[%c0_i32_69, %c4_i32, %arg14, %c0_i32_72] : memref<2x6x8x128xf32, #tpu.memory_space<vmem>> -> memref<1x1x1x128xf32, #tpu.memory_space<vmem>>
        %138 = tpu.memref_squeeze %137 : memref<1x1x1x128xf32, #tpu.memory_space<vmem>> -> memref<128xf32, #tpu.memory_space<vmem>>
        %139 = tpu.memref_slice %arg12[%c0_i32_70] : memref<2x!tpu.dma_semaphore, #tpu.memory_space<semaphore_mem>> -> memref<1x!tpu.dma_semaphore, #tpu.memory_space<semaphore_mem>>
        %140 = tpu.memref_squeeze %139 : memref<1x!tpu.dma_semaphore, #tpu.memory_space<semaphore_mem>> -> memref<!tpu.dma_semaphore, #tpu.memory_space<semaphore_mem>>
        tpu.enqueue_dma source(%136 : memref<128xf32, #tpu.memory_space<any>>) target(%138 : memref<128xf32, #tpu.memory_space<vmem>>) target_semaphore(%140 : memref<!tpu.dma_semaphore, #tpu.memory_space<semaphore_mem>>)
        %141 = arith.index_cast %100 : i32 to index
        %142 = memref.load %arg7[%141] : memref<16xi32, #tpu.memory_space<smem>>
        %c0_i32_73 = arith.constant 0 : i32
        %c5_i32 = arith.constant 5 : i32
        %c0_i32_74 = arith.constant 0 : i32
        %c0_i32_75 = arith.constant 0 : i32
        %143 = tpu.memref_slice %arg8[%142, %c0_i32_75] : memref<16x128xf32, #tpu.memory_space<any>> -> memref<1x128xf32, #tpu.memory_space<any>>
        %144 = tpu.memref_squeeze %143 : memref<1x128xf32, #tpu.memory_space<any>> -> memref<128xf32, #tpu.memory_space<any>>
        %c0_i32_76 = arith.constant 0 : i32
        %145 = tpu.memref_slice %arg11[%c0_i32_73, %c5_i32, %arg14, %c0_i32_76] : memref<2x6x8x128xf32, #tpu.memory_space<vmem>> -> memref<1x1x1x128xf32, #tpu.memory_space<vmem>>
        %146 = tpu.memref_squeeze %145 : memref<1x1x1x128xf32, #tpu.memory_space<vmem>> -> memref<128xf32, #tpu.memory_space<vmem>>
        %147 = tpu.memref_slice %arg12[%c0_i32_74] : memref<2x!tpu.dma_semaphore, #tpu.memory_space<semaphore_mem>> -> memref<1x!tpu.dma_semaphore, #tpu.memory_space<semaphore_mem>>
        %148 = tpu.memref_squeeze %147 : memref<1x!tpu.dma_semaphore, #tpu.memory_space<semaphore_mem>> -> memref<!tpu.dma_semaphore, #tpu.memory_space<semaphore_mem>>
        tpu.enqueue_dma source(%144 : memref<128xf32, #tpu.memory_space<any>>) target(%146 : memref<128xf32, #tpu.memory_space<vmem>>) target_semaphore(%148 : memref<!tpu.dma_semaphore, #tpu.memory_space<semaphore_mem>>)
      }
      %c8_i32_49 = arith.constant 8 : i32
    } else {
    }
    %c2_i32 = arith.constant 2 : i32
    %c0_i32_1 = arith.constant 0 : i32
    %5 = arith.cmpi eq, %c2_i32, %c0_i32_1 : i32
    %c1_i32_2 = arith.constant 1 : i32
    %6 = arith.select %5, %c1_i32_2, %c2_i32 : i32
    %7 = arith.remsi %arg1, %6 : i32
    %c0_i32_3 = arith.constant 0 : i32
    %8 = arith.cmpi ne, %7, %c0_i32_3 : i32
    %c0_i32_4 = arith.constant 0 : i32
    %9 = arith.cmpi slt, %7, %c0_i32_4 : i32
    %c0_i32_5 = arith.constant 0 : i32
    %10 = arith.cmpi slt, %6, %c0_i32_5 : i32
    %11 = arith.xori %9, %10 : i1
    %12 = arith.andi %11, %8 : i1
    %13 = arith.addi %7, %6 : i32
    %14 = arith.select %12, %13, %7 : i32
    %c0_i32_6 = arith.constant 0 : i32
    %c0_i32_7 = arith.constant 0 : i32
    %c0_i32_8 = arith.constant 0 : i32
    %15 = tpu.memref_slice %arg11[%14, %c0_i32_6, %c0_i32_7, %c0_i32_8] : memref<2x6x8x128xf32, #tpu.memory_space<vmem>> -> memref<1x6x8x128xf32, #tpu.memory_space<vmem>>
    %16 = tpu.memref_squeeze %15 : memref<1x6x8x128xf32, #tpu.memory_space<vmem>> -> memref<6x8x128xf32, #tpu.memory_space<vmem>>
    %c0_i32_9 = arith.constant 0 : i32
    %c0_i32_10 = arith.constant 0 : i32
    %c0_i32_11 = arith.constant 0 : i32
    %17 = tpu.memref_slice %arg11[%14, %c0_i32_9, %c0_i32_10, %c0_i32_11] : memref<2x6x8x128xf32, #tpu.memory_space<vmem>> -> memref<1x6x8x128xf32, #tpu.memory_space<vmem>>
    %18 = tpu.memref_squeeze %17 : memref<1x6x8x128xf32, #tpu.memory_space<vmem>> -> memref<6x8x128xf32, #tpu.memory_space<vmem>>
    %19 = tpu.memref_slice %arg12[%14] : memref<2x!tpu.dma_semaphore, #tpu.memory_space<semaphore_mem>> -> memref<1x!tpu.dma_semaphore, #tpu.memory_space<semaphore_mem>>
    %20 = tpu.memref_squeeze %19 : memref<1x!tpu.dma_semaphore, #tpu.memory_space<semaphore_mem>> -> memref<!tpu.dma_semaphore, #tpu.memory_space<semaphore_mem>>
    tpu.wait_dma2 semaphore(%20 : memref<!tpu.dma_semaphore, #tpu.memory_space<semaphore_mem>>) src(%16 : memref<6x8x128xf32, #tpu.memory_space<vmem>>) dst(%18 : memref<6x8x128xf32, #tpu.memory_space<vmem>>)
    %c1_i32_12 = arith.constant 1 : i32
    %21 = arith.addi %arg1, %c1_i32_12 : i32
    %c1_i32_13 = arith.constant 1 : i32
    %22 = arith.cmpi slt, %21, %c1_i32_13 : i32
    %23 = arith.extui %22 : i1 to i32
    %c0_i32_14 = arith.constant 0 : i32
    %24 = arith.cmpi ne, %23, %c0_i32_14 : i32
    scf.if %24 {
      %c1_i32_42 = arith.constant 1 : i32
      %96 = arith.addi %1, %c1_i32_42 : i32
      %c1_i32_43 = arith.constant 1 : i32
      %97 = arith.subi %c1_i32_43, %14 : i32
      %c8_i32_44 = arith.constant 8 : i32
      %98 = arith.muli %96, %c8_i32_44 : i32
      %c0_i32_45 = arith.constant 0 : i32
      %c8_i32_46 = arith.constant 8 : i32
      %99 = arith.addi %c0_i32_45, %c8_i32_46 : i32
      %c1_i32_47 = arith.constant 1 : i32
      scf.for %arg14 = %c0_i32_45 to %99 step %c1_i32_47  : i32 {
        %100 = arith.addi %98, %arg14 : i32
        %101 = arith.index_cast %100 : i32 to index
        %102 = memref.load %arg2[%101] : memref<16xi32, #tpu.memory_space<smem>>
        %c0_i32_49 = arith.constant 0 : i32
        %c0_i32_50 = arith.constant 0 : i32
        %103 = tpu.memref_slice %arg8[%102, %c0_i32_50] : memref<16x128xf32, #tpu.memory_space<any>> -> memref<1x128xf32, #tpu.memory_space<any>>
        %104 = tpu.memref_squeeze %103 : memref<1x128xf32, #tpu.memory_space<any>> -> memref<128xf32, #tpu.memory_space<any>>
        %c0_i32_51 = arith.constant 0 : i32
        %105 = tpu.memref_slice %arg11[%97, %c0_i32_49, %arg14, %c0_i32_51] : memref<2x6x8x128xf32, #tpu.memory_space<vmem>> -> memref<1x1x1x128xf32, #tpu.memory_space<vmem>>
        %106 = tpu.memref_squeeze %105 : memref<1x1x1x128xf32, #tpu.memory_space<vmem>> -> memref<128xf32, #tpu.memory_space<vmem>>
        %107 = tpu.memref_slice %arg12[%97] : memref<2x!tpu.dma_semaphore, #tpu.memory_space<semaphore_mem>> -> memref<1x!tpu.dma_semaphore, #tpu.memory_space<semaphore_mem>>
        %108 = tpu.memref_squeeze %107 : memref<1x!tpu.dma_semaphore, #tpu.memory_space<semaphore_mem>> -> memref<!tpu.dma_semaphore, #tpu.memory_space<semaphore_mem>>
        tpu.enqueue_dma source(%104 : memref<128xf32, #tpu.memory_space<any>>) target(%106 : memref<128xf32, #tpu.memory_space<vmem>>) target_semaphore(%108 : memref<!tpu.dma_semaphore, #tpu.memory_space<semaphore_mem>>)
        %109 = arith.index_cast %100 : i32 to index
        %110 = memref.load %arg3[%109] : memref<16xi32, #tpu.memory_space<smem>>
        %c1_i32_52 = arith.constant 1 : i32
        %c0_i32_53 = arith.constant 0 : i32
        %111 = tpu.memref_slice %arg9[%110, %c0_i32_53] : memref<4x128xf32, #tpu.memory_space<any>> -> memref<1x128xf32, #tpu.memory_space<any>>
        %112 = tpu.memref_squeeze %111 : memref<1x128xf32, #tpu.memory_space<any>> -> memref<128xf32, #tpu.memory_space<any>>
        %c0_i32_54 = arith.constant 0 : i32
        %113 = tpu.memref_slice %arg11[%97, %c1_i32_52, %arg14, %c0_i32_54] : memref<2x6x8x128xf32, #tpu.memory_space<vmem>> -> memref<1x1x1x128xf32, #tpu.memory_space<vmem>>
        %114 = tpu.memref_squeeze %113 : memref<1x1x1x128xf32, #tpu.memory_space<vmem>> -> memref<128xf32, #tpu.memory_space<vmem>>
        %115 = tpu.memref_slice %arg12[%97] : memref<2x!tpu.dma_semaphore, #tpu.memory_space<semaphore_mem>> -> memref<1x!tpu.dma_semaphore, #tpu.memory_space<semaphore_mem>>
        %116 = tpu.memref_squeeze %115 : memref<1x!tpu.dma_semaphore, #tpu.memory_space<semaphore_mem>> -> memref<!tpu.dma_semaphore, #tpu.memory_space<semaphore_mem>>
        tpu.enqueue_dma source(%112 : memref<128xf32, #tpu.memory_space<any>>) target(%114 : memref<128xf32, #tpu.memory_space<vmem>>) target_semaphore(%116 : memref<!tpu.dma_semaphore, #tpu.memory_space<semaphore_mem>>)
        %117 = arith.index_cast %100 : i32 to index
        %118 = memref.load %arg4[%117] : memref<16xi32, #tpu.memory_space<smem>>
        %c2_i32_55 = arith.constant 2 : i32
        %c0_i32_56 = arith.constant 0 : i32
        %119 = tpu.memref_slice %arg8[%118, %c0_i32_56] : memref<16x128xf32, #tpu.memory_space<any>> -> memref<1x128xf32, #tpu.memory_space<any>>
        %120 = tpu.memref_squeeze %119 : memref<1x128xf32, #tpu.memory_space<any>> -> memref<128xf32, #tpu.memory_space<any>>
        %c0_i32_57 = arith.constant 0 : i32
        %121 = tpu.memref_slice %arg11[%97, %c2_i32_55, %arg14, %c0_i32_57] : memref<2x6x8x128xf32, #tpu.memory_space<vmem>> -> memref<1x1x1x128xf32, #tpu.memory_space<vmem>>
        %122 = tpu.memref_squeeze %121 : memref<1x1x1x128xf32, #tpu.memory_space<vmem>> -> memref<128xf32, #tpu.memory_space<vmem>>
        %123 = tpu.memref_slice %arg12[%97] : memref<2x!tpu.dma_semaphore, #tpu.memory_space<semaphore_mem>> -> memref<1x!tpu.dma_semaphore, #tpu.memory_space<semaphore_mem>>
        %124 = tpu.memref_squeeze %123 : memref<1x!tpu.dma_semaphore, #tpu.memory_space<semaphore_mem>> -> memref<!tpu.dma_semaphore, #tpu.memory_space<semaphore_mem>>
        tpu.enqueue_dma source(%120 : memref<128xf32, #tpu.memory_space<any>>) target(%122 : memref<128xf32, #tpu.memory_space<vmem>>) target_semaphore(%124 : memref<!tpu.dma_semaphore, #tpu.memory_space<semaphore_mem>>)
        %125 = arith.index_cast %100 : i32 to index
        %126 = memref.load %arg5[%125] : memref<16xi32, #tpu.memory_space<smem>>
        %c3_i32 = arith.constant 3 : i32
        %c0_i32_58 = arith.constant 0 : i32
        %127 = tpu.memref_slice %arg8[%126, %c0_i32_58] : memref<16x128xf32, #tpu.memory_space<any>> -> memref<1x128xf32, #tpu.memory_space<any>>
        %128 = tpu.memref_squeeze %127 : memref<1x128xf32, #tpu.memory_space<any>> -> memref<128xf32, #tpu.memory_space<any>>
        %c0_i32_59 = arith.constant 0 : i32
        %129 = tpu.memref_slice %arg11[%97, %c3_i32, %arg14, %c0_i32_59] : memref<2x6x8x128xf32, #tpu.memory_space<vmem>> -> memref<1x1x1x128xf32, #tpu.memory_space<vmem>>
        %130 = tpu.memref_squeeze %129 : memref<1x1x1x128xf32, #tpu.memory_space<vmem>> -> memref<128xf32, #tpu.memory_space<vmem>>
        %131 = tpu.memref_slice %arg12[%97] : memref<2x!tpu.dma_semaphore, #tpu.memory_space<semaphore_mem>> -> memref<1x!tpu.dma_semaphore, #tpu.memory_space<semaphore_mem>>
        %132 = tpu.memref_squeeze %131 : memref<1x!tpu.dma_semaphore, #tpu.memory_space<semaphore_mem>> -> memref<!tpu.dma_semaphore, #tpu.memory_space<semaphore_mem>>
        tpu.enqueue_dma source(%128 : memref<128xf32, #tpu.memory_space<any>>) target(%130 : memref<128xf32, #tpu.memory_space<vmem>>) target_semaphore(%132 : memref<!tpu.dma_semaphore, #tpu.memory_space<semaphore_mem>>)
        %133 = arith.index_cast %100 : i32 to index
        %134 = memref.load %arg6[%133] : memref<16xi32, #tpu.memory_space<smem>>
        %c4_i32 = arith.constant 4 : i32
        %c0_i32_60 = arith.constant 0 : i32
        %135 = tpu.memref_slice %arg9[%134, %c0_i32_60] : memref<4x128xf32, #tpu.memory_space<any>> -> memref<1x128xf32, #tpu.memory_space<any>>
        %136 = tpu.memref_squeeze %135 : memref<1x128xf32, #tpu.memory_space<any>> -> memref<128xf32, #tpu.memory_space<any>>
        %c0_i32_61 = arith.constant 0 : i32
        %137 = tpu.memref_slice %arg11[%97, %c4_i32, %arg14, %c0_i32_61] : memref<2x6x8x128xf32, #tpu.memory_space<vmem>> -> memref<1x1x1x128xf32, #tpu.memory_space<vmem>>
        %138 = tpu.memref_squeeze %137 : memref<1x1x1x128xf32, #tpu.memory_space<vmem>> -> memref<128xf32, #tpu.memory_space<vmem>>
        %139 = tpu.memref_slice %arg12[%97] : memref<2x!tpu.dma_semaphore, #tpu.memory_space<semaphore_mem>> -> memref<1x!tpu.dma_semaphore, #tpu.memory_space<semaphore_mem>>
        %140 = tpu.memref_squeeze %139 : memref<1x!tpu.dma_semaphore, #tpu.memory_space<semaphore_mem>> -> memref<!tpu.dma_semaphore, #tpu.memory_space<semaphore_mem>>
        tpu.enqueue_dma source(%136 : memref<128xf32, #tpu.memory_space<any>>) target(%138 : memref<128xf32, #tpu.memory_space<vmem>>) target_semaphore(%140 : memref<!tpu.dma_semaphore, #tpu.memory_space<semaphore_mem>>)
        %141 = arith.index_cast %100 : i32 to index
        %142 = memref.load %arg7[%141] : memref<16xi32, #tpu.memory_space<smem>>
        %c5_i32 = arith.constant 5 : i32
        %c0_i32_62 = arith.constant 0 : i32
        %143 = tpu.memref_slice %arg8[%142, %c0_i32_62] : memref<16x128xf32, #tpu.memory_space<any>> -> memref<1x128xf32, #tpu.memory_space<any>>
        %144 = tpu.memref_squeeze %143 : memref<1x128xf32, #tpu.memory_space<any>> -> memref<128xf32, #tpu.memory_space<any>>
        %c0_i32_63 = arith.constant 0 : i32
        %145 = tpu.memref_slice %arg11[%97, %c5_i32, %arg14, %c0_i32_63] : memref<2x6x8x128xf32, #tpu.memory_space<vmem>> -> memref<1x1x1x128xf32, #tpu.memory_space<vmem>>
        %146 = tpu.memref_squeeze %145 : memref<1x1x1x128xf32, #tpu.memory_space<vmem>> -> memref<128xf32, #tpu.memory_space<vmem>>
        %147 = tpu.memref_slice %arg12[%97] : memref<2x!tpu.dma_semaphore, #tpu.memory_space<semaphore_mem>> -> memref<1x!tpu.dma_semaphore, #tpu.memory_space<semaphore_mem>>
        %148 = tpu.memref_squeeze %147 : memref<1x!tpu.dma_semaphore, #tpu.memory_space<semaphore_mem>> -> memref<!tpu.dma_semaphore, #tpu.memory_space<semaphore_mem>>
        tpu.enqueue_dma source(%144 : memref<128xf32, #tpu.memory_space<any>>) target(%146 : memref<128xf32, #tpu.memory_space<vmem>>) target_semaphore(%148 : memref<!tpu.dma_semaphore, #tpu.memory_space<semaphore_mem>>)
      }
      %c8_i32_48 = arith.constant 8 : i32
    } else {
    }
    %25 = arith.index_cast %14 : i32 to index
    %c0 = arith.constant 0 : index
    %c0_15 = arith.constant 0 : index
    %c0_16 = arith.constant 0 : index
    %26 = vector.load %arg11[%25, %c0, %c0_15, %c0_16] : memref<2x6x8x128xf32, #tpu.memory_space<vmem>>, vector<1x1x8x128xf32>
    %27 = vector.shape_cast %26 : vector<1x1x8x128xf32> to vector<8x128xf32>
    %28 = arith.index_cast %14 : i32 to index
    %c1 = arith.constant 1 : index
    %c0_17 = arith.constant 0 : index
    %c0_18 = arith.constant 0 : index
    %29 = vector.load %arg11[%28, %c1, %c0_17, %c0_18] : memref<2x6x8x128xf32, #tpu.memory_space<vmem>>, vector<1x1x8x128xf32>
    %30 = vector.shape_cast %29 : vector<1x1x8x128xf32> to vector<8x128xf32>
    %31 = arith.index_cast %14 : i32 to index
    %c2 = arith.constant 2 : index
    %c0_19 = arith.constant 0 : index
    %c0_20 = arith.constant 0 : index
    %32 = vector.load %arg11[%31, %c2, %c0_19, %c0_20] : memref<2x6x8x128xf32, #tpu.memory_space<vmem>>, vector<1x1x8x128xf32>
    %33 = vector.shape_cast %32 : vector<1x1x8x128xf32> to vector<8x128xf32>
    %34 = arith.index_cast %14 : i32 to index
    %c3 = arith.constant 3 : index
    %c0_21 = arith.constant 0 : index
    %c0_22 = arith.constant 0 : index
    %35 = vector.load %arg11[%34, %c3, %c0_21, %c0_22] : memref<2x6x8x128xf32, #tpu.memory_space<vmem>>, vector<1x1x8x128xf32>
    %36 = vector.shape_cast %35 : vector<1x1x8x128xf32> to vector<8x128xf32>
    %37 = arith.index_cast %14 : i32 to index
    %c4 = arith.constant 4 : index
    %c0_23 = arith.constant 0 : index
    %c0_24 = arith.constant 0 : index
    %38 = vector.load %arg11[%37, %c4, %c0_23, %c0_24] : memref<2x6x8x128xf32, #tpu.memory_space<vmem>>, vector<1x1x8x128xf32>
    %39 = vector.shape_cast %38 : vector<1x1x8x128xf32> to vector<8x128xf32>
    %40 = arith.index_cast %14 : i32 to index
    %c5 = arith.constant 5 : index
    %c0_25 = arith.constant 0 : index
    %c0_26 = arith.constant 0 : index
    %41 = vector.load %arg11[%40, %c5, %c0_25, %c0_26] : memref<2x6x8x128xf32, #tpu.memory_space<vmem>>, vector<1x1x8x128xf32>
    %42 = vector.shape_cast %41 : vector<1x1x8x128xf32> to vector<8x128xf32>
    %43 = arith.mulf %27, %27 : vector<8x128xf32>
    %cst = arith.constant dense<0.000000e+00> : vector<8xf32>
    %44 = vector.multi_reduction <add>, %43, %cst [1] : vector<8x128xf32> to vector<8xf32>
    %45 = vector.shape_cast %44 : vector<8xf32> to vector<8x1xf32>
    %46 = math.rsqrt %45 : vector<8x1xf32>
    %47 = vector.broadcast %46 : vector<8x1xf32> to vector<8x128xf32>
    %48 = arith.mulf %27, %47 : vector<8x128xf32>
    %49 = arith.mulf %33, %33 : vector<8x128xf32>
    %cst_27 = arith.constant dense<0.000000e+00> : vector<8xf32>
    %50 = vector.multi_reduction <add>, %49, %cst_27 [1] : vector<8x128xf32> to vector<8xf32>
    %51 = vector.shape_cast %50 : vector<8xf32> to vector<8x1xf32>
    %52 = math.rsqrt %51 : vector<8x1xf32>
    %53 = vector.broadcast %52 : vector<8x1xf32> to vector<8x128xf32>
    %54 = arith.mulf %33, %53 : vector<8x128xf32>
    %55 = arith.addf %48, %30 : vector<8x128xf32>
    %56 = arith.subf %55, %54 : vector<8x128xf32>
    %57 = math.absf %56 : vector<8x128xf32>
    %cst_28 = arith.constant dense<0.000000e+00> : vector<8xf32>
    %58 = vector.multi_reduction <add>, %57, %cst_28 [1] : vector<8x128xf32> to vector<8xf32>
    %59 = vector.shape_cast %58 : vector<8xf32> to vector<8x1xf32>
    %60 = arith.mulf %36, %36 : vector<8x128xf32>
    %cst_29 = arith.constant dense<0.000000e+00> : vector<8xf32>
    %61 = vector.multi_reduction <add>, %60, %cst_29 [1] : vector<8x128xf32> to vector<8xf32>
    %62 = vector.shape_cast %61 : vector<8xf32> to vector<8x1xf32>
    %63 = math.rsqrt %62 : vector<8x1xf32>
    %64 = vector.broadcast %63 : vector<8x1xf32> to vector<8x128xf32>
    %65 = arith.mulf %36, %64 : vector<8x128xf32>
    %66 = arith.mulf %42, %42 : vector<8x128xf32>
    %cst_30 = arith.constant dense<0.000000e+00> : vector<8xf32>
    %67 = vector.multi_reduction <add>, %66, %cst_30 [1] : vector<8x128xf32> to vector<8xf32>
    %68 = vector.shape_cast %67 : vector<8xf32> to vector<8x1xf32>
    %69 = math.rsqrt %68 : vector<8x1xf32>
    %70 = vector.broadcast %69 : vector<8x1xf32> to vector<8x128xf32>
    %71 = arith.mulf %42, %70 : vector<8x128xf32>
    %72 = arith.addf %65, %39 : vector<8x128xf32>
    %73 = arith.subf %72, %71 : vector<8x128xf32>
    %74 = math.absf %73 : vector<8x128xf32>
    %cst_31 = arith.constant dense<0.000000e+00> : vector<8xf32>
    %75 = vector.multi_reduction <add>, %74, %cst_31 [1] : vector<8x128xf32> to vector<8xf32>
    %76 = vector.shape_cast %75 : vector<8xf32> to vector<8x1xf32>
    %77 = arith.subf %59, %76 : vector<8x1xf32>
    %cst_32 = arith.constant 1.000000e+00 : f32
    %78 = vector.broadcast %cst_32 : f32 to vector<8x1xf32>
    %79 = arith.addf %77, %78 : vector<8x1xf32>
    %cst_33 = arith.constant 0.000000e+00 : f32
    %80 = vector.broadcast %cst_33 : f32 to vector<8x1xf32>
    %81 = arith.maximumf %79, %80 : vector<8x1xf32>
    %c8_i32 = arith.constant 8 : i32
    %82 = arith.muli %1, %c8_i32 : i32
    %83 = tpu.iota {dimensions = array<i32: 0>} : vector<8x1xi32>
    %84 = vector.broadcast %82 : i32 to vector<8x1xi32>
    %85 = arith.addi %84, %83 : vector<8x1xi32>
    %c8_i32_34 = arith.constant 8 : i32
    %86 = vector.broadcast %c8_i32_34 : i32 to vector<8x1xi32>
    %87 = arith.cmpi slt, %85, %86 : vector<8x1xi32>
    %cst_35 = arith.constant 0.000000e+00 : f32
    %88 = vector.broadcast %cst_35 : f32 to vector<8x1xf32>
    %89 = arith.select %87, %81, %88 : vector<8x1xi1>, vector<8x1xf32>
    %c0_36 = arith.constant 0 : index
    %c0_37 = arith.constant 0 : index
    %90 = vector.load %arg13[%c0_36, %c0_37] : memref<8x1xf32, #tpu.memory_space<vmem>>, vector<8x1xf32>
    %91 = arith.addf %90, %89 : vector<8x1xf32>
    %c0_38 = arith.constant 0 : index
    %c0_39 = arith.constant 0 : index
    %92 = vector.load %arg13[%c0_38, %c0_39] : memref<8x1xf32, #tpu.memory_space<vmem>>, vector<8x1xf32>
    tpu.vector_store %arg13[%c0_38, %c0_39], %91 {strides = array<i32>} : memref<8x1xf32, #tpu.memory_space<vmem>>, vector<8x1xf32>,
    %c0_i32_40 = arith.constant 0 : i32
    %93 = arith.cmpi eq, %arg1, %c0_i32_40 : i32
    %94 = arith.extui %93 : i1 to i32
    %c0_i32_41 = arith.constant 0 : i32
    %95 = arith.cmpi ne, %94, %c0_i32_41 : i32
    scf.if %95 {
      %c0_42 = arith.constant 0 : index
      %c0_43 = arith.constant 0 : index
      %96 = vector.load %arg13[%c0_42, %c0_43] : memref<8x1xf32, #tpu.memory_space<vmem>>, vector<8x1xf32>
      %97 = vector.shape_cast %96 : vector<8x1xf32> to vector<1x8x1xf32>
      %cst_44 = arith.constant dense<0.000000e+00> : vector<1xf32>
      %98 = vector.multi_reduction <add>, %97, %cst_44 [1, 2] : vector<1x8x1xf32> to vector<1xf32>
      %99 = vector.shape_cast %98 : vector<1xf32> to vector<1x1x1xf32>
      %100 = vector.extract %99[0, 0, 0] : f32 from vector<1x1x1xf32>
      %101 = vector.broadcast %100 : f32 to vector<1x1x1xf32>
      %c0_45 = arith.constant 0 : index
      %c0_46 = arith.constant 0 : index
      %c0_47 = arith.constant 0 : index
      %102 = vector.load %arg10[%c0_45, %c0_46, %c0_47] : memref<1x1x1xf32, #tpu.memory_space<vmem>>, vector<1x1x1xf32>
      tpu.vector_store %arg10[%c0_45, %c0_46, %c0_47], %101 {strides = array<i32>} : memref<1x1x1xf32, #tpu.memory_space<vmem>>, vector<1x1x1xf32>,
    } else {
    }
    return
  }
  func.func @transform_2(%arg0: i32, %arg1: i32, %arg2: memref<16xi32, #tpu.memory_space<smem>>, %arg3: memref<16xi32, #tpu.memory_space<smem>>, %arg4: memref<16xi32, #tpu.memory_space<smem>>, %arg5: memref<16xi32, #tpu.memory_space<smem>>, %arg6: memref<16xi32, #tpu.memory_space<smem>>, %arg7: memref<16xi32, #tpu.memory_space<smem>>) -> (i32, i32, i32) {
    %c0_i32 = arith.constant 0 : i32
    %c0_i32_0 = arith.constant 0 : i32
    %c0_i32_1 = arith.constant 0 : i32
    return %arg0, %c0_i32, %c0_i32_0 : i32, i32, i32
  }
}

</mosaic_0001>

<llo_original>
// kernel: tpu_custom_call.1
$region0: #{tpu_custom_call.1}
  #allocation0 [shape = 'u32[]', space=smem, size = 0x4, offset = 0x4, fixed_abs, tag = 'smem constant byte address 0x4 - core index']
  #allocation1 [shape = 'u32[72,128]{1,0:T(1,128)}', space=vmem, size = 0x9000, scoped, tag = 'internal scratch']
  #allocation2 [shape = 'f32[2,6,8,128]{3,2,1,0:T(8,128)}', space=vmem, size = 0xc000, scoped, tag = 'scratch operand']
  #allocation3 [shape = 's32[2]{0}', space=sflag, size = 0x8, scoped, tag = 'scratch operand']
  #allocation4 [shape = 'f32[8,1]{1,0:T(8,128)}', space=vmem, size = 0x1000, scoped, tag = 'scratch operand']
  #allocation5 [shape = 's32[1]{0}', space=sflag, size = 0x4, scoped, tag = 'scoped memory for tpu_custom_call.1']
  #allocation6 [shape = 'u8[512]{0}', space=smem, size = 0x200, scoped, tag = 'prefetched SMEM operand 0']
  #allocation7 [shape = 'u8[512]{0}', space=smem, size = 0x200, scoped, tag = 'prefetched SMEM operand 1']
  #allocation8 [shape = 'u8[512]{0}', space=smem, size = 0x200, scoped, tag = 'prefetched SMEM operand 2']
  #allocation9 [shape = 'u8[512]{0}', space=smem, size = 0x200, scoped, tag = 'prefetched SMEM operand 3']
  #allocation10 [shape = 'u8[512]{0}', space=smem, size = 0x200, scoped, tag = 'prefetched SMEM operand 4']
  #allocation11 [shape = 'u8[512]{0}', space=smem, size = 0x200, scoped, tag = 'prefetched SMEM operand 5']
  #allocation12 [shape = 's32[]', space=sflag, size = 0x4, offset = 0, fixed_abs, tag = 'sflag constant byte address 0x0 - dummy sync flag']
  #allocation13 [shape = 's32[]', space=sflag, size = 0x4, offset = 0, fixed_abs, tag = 'sflag constant byte address 0x0 - dummy sync flag']
  #allocation14 [shape = 'u32[]', space=smem, size = 0x4, offset = 0x44, fixed_abs, tag = 'smem constant byte address 0x44 - assertion arg 0']
  #allocation15 [shape = 'u32[]', space=smem, size = 0x4, offset = 0x48, fixed_abs, tag = 'smem constant byte address 0x48 - assertion arg 1']
  #allocation16 [shape = 's32[]', space=sflag, size = 0x4, offset = 0, fixed_abs, tag = 'sflag constant byte address 0x0 - dummy sync flag']
  #allocation17 [shape = 's32[]', space=sflag, size = 0x4, offset = 0, fixed_abs, tag = 'sflag constant byte address 0x0 - dummy sync flag']
  #allocation18 [shape = 's32[]', space=sflag, size = 0x4, offset = 0, fixed_abs, tag = 'sflag constant byte address 0x0 - dummy sync flag']
  #allocation19 [shape = 's32[]', space=sflag, size = 0x4, offset = 0, fixed_abs, tag = 'sflag constant byte address 0x0 - dummy sync flag']
  #allocation20 [shape = 's32[]', space=sflag, size = 0x4, offset = 0, fixed_abs, tag = 'sflag constant byte address 0x0 - dummy sync flag']
  #allocation21 [shape = 's32[]', space=sflag, size = 0x4, offset = 0, fixed_abs, tag = 'sflag constant byte address 0x0 - dummy sync flag']
  #allocation22 [shape = 's32[]', space=sflag, size = 0x4, offset = 0, fixed_abs, tag = 'sflag constant byte address 0x0 - dummy sync flag']
  #allocation23 [shape = 's32[]', space=sflag, size = 0x4, offset = 0, fixed_abs, tag = 'sflag constant byte address 0x0 - dummy sync flag']
  #allocation24 [shape = 's32[]', space=sflag, size = 0x4, offset = 0, fixed_abs, tag = 'sflag constant byte address 0x0 - dummy sync flag']
  #allocation25 [shape = 's32[]', space=sflag, size = 0x4, offset = 0, fixed_abs, tag = 'sflag constant byte address 0x0 - dummy sync flag']
  #allocation26 [shape = 's32[]', space=sflag, size = 0x4, offset = 0, fixed_abs, tag = 'sflag constant byte address 0x0 - dummy sync flag']
  #allocation27 [shape = 's32[]', space=sflag, size = 0x4, offset = 0, fixed_abs, tag = 'sflag constant byte address 0x0 - dummy sync flag']
  #allocation28 [shape = 's32[]', space=sflag, size = 0x4, offset = 0, fixed_abs, tag = 'sflag constant byte address 0x0 - dummy sync flag']
  #allocation29 [shape = 's32[]', space=sflag, size = 0x4, offset = 0, fixed_abs, tag = 'sflag constant byte address 0x0 - dummy sync flag']
  #allocation30 [shape = 's32[]', space=sflag, size = 0x4, offset = 0, fixed_abs, tag = 'sflag constant byte address 0x0 - dummy sync flag']
  #allocation31 [shape = 's32[]', space=sflag, size = 0x4, offset = 0, fixed_abs, tag = 'sflag constant byte address 0x0 - dummy sync flag']
  #allocation32 [shape = 's32[]', space=sflag, size = 0x4, offset = 0, fixed_abs, tag = 'sflag constant byte address 0x0 - dummy sync flag']
  #allocation33 [shape = 's32[]', space=sflag, size = 0x4, offset = 0, fixed_abs, tag = 'sflag constant byte address 0x0 - dummy sync flag']
  %s0 = inlined_call_operand.hbm [shape: s32[16], index: 0, kind: input, shape index: {}]
  %s1 = inlined_call_operand.hbm [shape: s32[16], index: 1, kind: input, shape index: {}]
  %s2 = inlined_call_operand.vmem [shape: s32[16], index: 2, kind: input, shape index: {}]
  %s3 = inlined_call_operand.vmem [shape: s32[16], index: 3, kind: input, shape index: {}]
  %s4 = inlined_call_operand.hbm [shape: s32[16], index: 4, kind: input, shape index: {}]
  %s5 = inlined_call_operand.hbm [shape: s32[16], index: 5, kind: input, shape index: {}]
  %s6 = inlined_call_operand.hbm [shape: f32[16,128], index: 6, kind: input, shape index: {}]
  %s7 = inlined_call_operand.vmem [shape: f32[4,128], index: 7, kind: input, shape index: {}]
  %s8 = inlined_call_operand.vmem [shape: f32[2,1,1], index: 8, kind: output, shape index: {}]
  %s9 = sld [smem:[#allocation0]]
  $region203: #{tpu_custom_call.1} parent=0
    _
  %s11 = ssub.s32 1, %s9
  %s12 = scalar_select 0, %s11, %s9
  %s14 = sshll.u32 %s0, 4
  %s15 = int_to_ptr.hbm [resolvable:$true] %s14
  %17 = dma.hbm_to_smem %s15, 16, [#allocation6], [#allocation5]
  %s19 = sshll.u32 %s1, 4
  %s20 = int_to_ptr.hbm [resolvable:$true] %s19
  %22 = dma.hbm_to_smem %s20, 16, [#allocation7], [#allocation5]
  %s24 = sshll.u32 %s2, 4
  %s25 = int_to_ptr.vmem [resolvable:$true] %s24
  %27 = dma.vmem_to_smem %s25, 16, [#allocation8], [#allocation5]
  %s29 = sshll.u32 %s3, 4
  %s30 = int_to_ptr.vmem [resolvable:$true] %s29
  %32 = dma.vmem_to_smem %s30, 16, [#allocation9], [#allocation5]
  %s34 = sshll.u32 %s4, 4
  %s35 = int_to_ptr.hbm [resolvable:$true] %s34
  %37 = dma.hbm_to_smem %s35, 16, [#allocation10], [#allocation5]
  %s39 = sshll.u32 %s5, 4
  %s40 = int_to_ptr.hbm [resolvable:$true] %s39
  %42 = dma.hbm_to_smem %s40, 16, [#allocation11], [#allocation5]
  %44 = dma.done [#allocation5], 96
  %45 = sfence
  loop: start=0, step=1, limit=3
  $region2: #{tpu_custom_call.1} parent=0 // loop_pre_header
    _
  $region3: #{tpu_custom_call.1} parent=0 // loop_header
    %s47 = sphi 0, %s51
    %p48 = scmp.ge.s32.totalorder %s47, 3
    %s53 = sphi 0, %s63
    %s54 = sphi 0, %s59
    %s55 = sphi 0, %s53
    %s56 = sphi 0, %s54
    %s66 = sphi 0, %s68
    %s69 = sphi 0, %s66
    %s79 = sphi 0, %s69
  $region4: #{tpu_custom_call.1} parent=0 // loop_header_branch
    %50 = sbr.rel (%p48) target = $region8
  $region5: #{tpu_custom_call.1} parent=0 // loop_body
    %s52 = ssub.s32 %s47, 1
    %s57 = sadd.s32 1, %s54
    %p58 = scmp.ge.s32.totalorder %s57, 1
    %s59 = scalar_select %p58, 0, %s57
    %s60 = sadd.s32 1, %s53
    %s61 = scalar_select %p58, %s60, %s53
    %p62 = scmp.ge.s32.totalorder %s61, 2
    %s63 = scalar_select %p62, 0, %s61
    %s64 = ssub.s32 %s53, %s63
    %p65 = scmp.eq.s32.totalorder %s64, 0
    %s67 = sadd.s32 %s66, 1
    %s68 = scalar_select %p65, %s66, %s67
    %p70 = pneg %p65
    %p71 = scmp.eq.s32.totalorder %s47, 1
    %p72 = por %p70, %p71
    %p73 = scmp.ne.s32.totalorder %s66, %s69
    %p74 = scmp.eq.s32.totalorder %s47, 0
    %p75 = por %p73, %p74
    %p76 = scmp.ne.s32.totalorder %s66, %s69
    %p77 = scmp.eq.s32.totalorder %s52, 1
    %p78 = por %p76, %p77
    %p80 = scmp.ne.s32.totalorder %s69, %s79
    %p81 = scmp.eq.s32.totalorder %s52, 0
    %p82 = por %p80, %p81
    %p83 = scmp.lt.s32.totalorder %s47, 2
    // Predicated region
    $region9: #{tpu_custom_call.1} parent=5 // pred_check
      %p84 = pneg %p83
    $region10: #{tpu_custom_call.1} parent=5 // pred_check_branch
      %86 = sbr.rel (%p84) target = $region12
    $region11: #{tpu_custom_call.1} parent=5 // pred_region
      %p87 = pneg %p75
      %p88 = pneg %p72
      %p89 = scmp.lt.s32.totalorder %s53, 1
      %s90 = scalar_select %p89, %s53, 1
      %s91 = scalar_lea.vmem %s8, %s90
      %p92 = scmp.lt.s32.totalorder %s53, 1
      %s93 = scalar_select %p92, %s53, 1
      %s94 = scalar_lea.vmem %s8, %s93
      %s95 = sadd.s32 %s53, %s54
      %p96 = scmp.eq.s32.totalorder %s54, 0
      // Predicated region
      $region13: #{tpu_custom_call.1} parent=11 // pred_check
        %p97 = pneg %p96
      $region14: #{tpu_custom_call.1} parent=11 // pred_check_branch
        %99 = sbr.rel (%p97) target = $region16
      $region15: #{tpu_custom_call.1} parent=11 // pred_region
        %vm100 = vcmask 7168
        %101 = vst.msk [vmem:[#allocation4] sm:$0xff] %vm100, 0.0
        %s102 = smul.u32 %s95, 8
        loop: start=0, step=1, limit=8
        $region17: #{tpu_custom_call.1} parent=15 // loop_pre_header
          _
        $region18: #{tpu_custom_call.1} parent=15 // loop_header
          %s104 = sphi 0, %s108
          %p105 = scmp.ge.s32.totalorder %s104, 8
        $region19: #{tpu_custom_call.1} parent=15 // loop_header_branch
          %107 = sbr.rel (%p105) target = $region23
        $region20: #{tpu_custom_call.1} parent=15 // loop_body
          %s109 = sadd.s32 %s102, %s104
          %s110 = sld [smem:[#allocation6 + %s109]]
          %s111 = scalar_lea.hbm %s6, %s110
          %s112 = scalar_lea.vmem [#allocation2], %s104
          // Predicated region
          $region24: #{tpu_custom_call.1} parent=20 // pred_check
            _
          $region25: #{tpu_custom_call.1} parent=20 // pred_check_branch
            %114 = sbr.rel target = $region27
          $region26: #{tpu_custom_call.1} parent=20 // pred_region
            %115 = sst [smem:[#allocation14]] [#allocation13]
            %116 = sst [smem:[#allocation15]] [#allocation12]
          $region27: #{tpu_custom_call.1} parent=20 // pred_fallthru
            _
          %118 = shalt.err (0)
          %s120 = sshll.u32 %s111, 4
          %s121 = int_to_ptr.hbm [resolvable:$true] %s120
          %s122 = sshll.u32 %s112, 4
          %s123 = int_to_ptr.vmem [resolvable:$true] %s122
          %125 = dma.hbm_to_vmem [thread:$0]  %s121, 16, %s123, [#allocation3]
          %s126 = sld [smem:[#allocation7 + %s109]]
          %s127 = scalar_lea.vmem %s7, %s126
          %s128 = sadd.s32 %s104, 8
          %s129 = scalar_lea.vmem [#allocation2], %s128
          // Predicated region
          $region28: #{tpu_custom_call.1} parent=20 // pred_check
            _
          $region29: #{tpu_custom_call.1} parent=20 // pred_check_branch
            %131 = sbr.rel target = $region31
          $region30: #{tpu_custom_call.1} parent=20 // pred_region
            // Predicated region
            $region43: #{tpu_custom_call.1} parent=30 // pred_check
              _
            $region44: #{tpu_custom_call.1} parent=30 // pred_check_branch
              %147 = sbr.rel (0) target = $region46
            $region45: #{tpu_custom_call.1} parent=30 // pred_region
              %s149 = ssub.s32 2, 1
              loop: start=0, step=1, limit=1
              $region47: #{tpu_custom_call.1} parent=45 // loop_pre_header
                _
              $region48: #{tpu_custom_call.1} parent=45 // loop_header
                %s151 = sphi 0, %s155
                %p152 = scmp.ge.s32.totalorder %s151, 1
                %s156 = sphi %s127, %s127
                %s157 = sphi %s129, %s129
              $region49: #{tpu_custom_call.1} parent=45 // loop_header_branch
                %154 = sbr.rel (%p152) target = $region53
              $region50: #{tpu_custom_call.1} parent=45 // loop_body
                %v158 = vld [vmem:[%s156] sm:%s149]
                %159 = vst [vmem:[%s157] sm:%s149] %v158
              $region51: #{tpu_custom_call.1} parent=45 // loop_footer
                %s155 = sadd.s32 1, %s151
              $region52: #{tpu_custom_call.1} parent=45 // loop_footer_branch
                %150 = sbr.rel target = $region48
              $region53: #{tpu_custom_call.1} parent=45 // loop_exit
                _
            $region46: #{tpu_custom_call.1} parent=30 // pred_fallthru
              _
          $region31: #{tpu_custom_call.1} parent=20 // pred_fallthru
            _
          // Predicated region
          $region32: #{tpu_custom_call.1} parent=20 // pred_check
            _
          $region33: #{tpu_custom_call.1} parent=20 // pred_check_branch
            %133 = sbr.rel (0) target = $region35
          $region34: #{tpu_custom_call.1} parent=20 // pred_region
            %s135 = ssub.s32 2, 1
            loop: start=0, step=1, limit=1
            $region36: #{tpu_custom_call.1} parent=34 // loop_pre_header
              _
            $region37: #{tpu_custom_call.1} parent=34 // loop_header
              %s137 = sphi 0, %s141
              %p138 = scmp.ge.s32.totalorder %s137, 1
              %s142 = sphi %s127, %s127
              %s143 = sphi %s129, %s129
            $region38: #{tpu_custom_call.1} parent=34 // loop_header_branch
              %140 = sbr.rel (%p138) target = $region42
            $region39: #{tpu_custom_call.1} parent=34 // loop_body
              %v144 = vld [vmem:[%s142] sm:%s135]
              %145 = vst [vmem:[%s143] sm:%s135] %v144
            $region40: #{tpu_custom_call.1} parent=34 // loop_footer
              %s141 = sadd.s32 1, %s137
            $region41: #{tpu_custom_call.1} parent=34 // loop_footer_branch
              %136 = sbr.rel target = $region37
            $region42: #{tpu_custom_call.1} parent=34 // loop_exit
              _
          $region35: #{tpu_custom_call.1} parent=20 // pred_fallthru
            _
          // Predicated region
          $region54: #{tpu_custom_call.1} parent=20 // pred_check
            _
          $region55: #{tpu_custom_call.1} parent=20 // pred_check_branch
            %162 = sbr.rel (0) target = $region57
          $region56: #{tpu_custom_call.1} parent=20 // pred_region
            %163 = vsyncadd [#allocation3], 16
          $region57: #{tpu_custom_call.1} parent=20 // pred_fallthru
            _
          %s164 = sld [smem:[#allocation8 + %s109]]
          %s165 = scalar_lea.hbm %s6, %s164
          %s166 = sadd.s32 %s104, 16
          %s167 = scalar_lea.vmem [#allocation2], %s166
          // Predicated region
          $region58: #{tpu_custom_call.1} parent=20 // pred_check
            _
          $region59: #{tpu_custom_call.1} parent=20 // pred_check_branch
            %169 = sbr.rel target = $region61
          $region60: #{tpu_custom_call.1} parent=20 // pred_region
            %170 = sst [smem:[#allocation14]] [#allocation18]
            %171 = sst [smem:[#allocation15]] [#allocation17]
          $region61: #{tpu_custom_call.1} parent=20 // pred_fallthru
            _
          %173 = shalt.err (0)
          %s175 = sshll.u32 %s165, 4
          %s176 = int_to_ptr.hbm [resolvable:$true] %s175
          %s177 = sshll.u32 %s167, 4
          %s178 = int_to_ptr.vmem [resolvable:$true] %s177
          %180 = dma.hbm_to_vmem [thread:$0]  %s176, 16, %s178, [#allocation3]
          %s181 = sld [smem:[#allocation9 + %s109]]
          %s182 = scalar_lea.hbm %s6, %s181
          %s183 = sadd.s32 %s104, 24
          %s184 = scalar_lea.vmem [#allocation2], %s183
          // Predicated region
          $region62: #{tpu_custom_call.1} parent=20 // pred_check
            _
          $region63: #{tpu_custom_call.1} parent=20 // pred_check_branch
            %186 = sbr.rel target = $region65
          $region64: #{tpu_custom_call.1} parent=20 // pred_region
            %187 = sst [smem:[#allocation14]] [#allocation20]
            %188 = sst [smem:[#allocation15]] [#allocation19]
          $region65: #{tpu_custom_call.1} parent=20 // pred_fallthru
            _
          %190 = shalt.err (0)
          %s192 = sshll.u32 %s182, 4
          %s193 = int_to_ptr.hbm [resolvable:$true] %s192
          %s194 = sshll.u32 %s184, 4
          %s195 = int_to_ptr.vmem [resolvable:$true] %s194
          %197 = dma.hbm_to_vmem [thread:$0]  %s193, 16, %s195, [#allocation3]
          %s198 = sld [smem:[#allocation10 + %s109]]
          %s199 = scalar_lea.vmem %s7, %s198
          %s200 = sadd.s32 %s104, 32
          %s201 = scalar_lea.vmem [#allocation2], %s200
          // Predicated region
          $region66: #{tpu_custom_call.1} parent=20 // pred_check
            _
          $region67: #{tpu_custom_call.1} parent=20 // pred_check_branch
            %203 = sbr.rel target = $region69
          $region68: #{tpu_custom_call.1} parent=20 // pred_region
            // Predicated region
            $region81: #{tpu_custom_call.1} parent=68 // pred_check
              _
            $region82: #{tpu_custom_call.1} parent=68 // pred_check_branch
              %219 = sbr.rel (0) target = $region84
            $region83: #{tpu_custom_call.1} parent=68 // pred_region
              %s221 = ssub.s32 2, 1
              loop: start=0, step=1, limit=1
              $region85: #{tpu_custom_call.1} parent=83 // loop_pre_header
                _
              $region86: #{tpu_custom_call.1} parent=83 // loop_header
                %s223 = sphi 0, %s227
                %p224 = scmp.ge.s32.totalorder %s223, 1
                %s228 = sphi %s199, %s199
                %s229 = sphi %s201, %s201
              $region87: #{tpu_custom_call.1} parent=83 // loop_header_branch
                %226 = sbr.rel (%p224) target = $region91
              $region88: #{tpu_custom_call.1} parent=83 // loop_body
                %v230 = vld [vmem:[%s228] sm:%s221]
                %231 = vst [vmem:[%s229] sm:%s221] %v230
              $region89: #{tpu_custom_call.1} parent=83 // loop_footer
                %s227 = sadd.s32 1, %s223
              $region90: #{tpu_custom_call.1} parent=83 // loop_footer_branch
                %222 = sbr.rel target = $region86
              $region91: #{tpu_custom_call.1} parent=83 // loop_exit
                _
            $region84: #{tpu_custom_call.1} parent=68 // pred_fallthru
              _
          $region69: #{tpu_custom_call.1} parent=20 // pred_fallthru
            _
          // Predicated region
          $region70: #{tpu_custom_call.1} parent=20 // pred_check
            _
          $region71: #{tpu_custom_call.1} parent=20 // pred_check_branch
            %205 = sbr.rel (0) target = $region73
          $region72: #{tpu_custom_call.1} parent=20 // pred_region
            %s207 = ssub.s32 2, 1
            loop: start=0, step=1, limit=1
            $region74: #{tpu_custom_call.1} parent=72 // loop_pre_header
              _
            $region75: #{tpu_custom_call.1} parent=72 // loop_header
              %s209 = sphi 0, %s213
              %p210 = scmp.ge.s32.totalorder %s209, 1
              %s214 = sphi %s199, %s199
              %s215 = sphi %s201, %s201
            $region76: #{tpu_custom_call.1} parent=72 // loop_header_branch
              %212 = sbr.rel (%p210) target = $region80
            $region77: #{tpu_custom_call.1} parent=72 // loop_body
              %v216 = vld [vmem:[%s214] sm:%s207]
              %217 = vst [vmem:[%s215] sm:%s207] %v216
            $region78: #{tpu_custom_call.1} parent=72 // loop_footer
              %s213 = sadd.s32 1, %s209
            $region79: #{tpu_custom_call.1} parent=72 // loop_footer_branch
              %208 = sbr.rel target = $region75
            $region80: #{tpu_custom_call.1} parent=72 // loop_exit
              _
          $region73: #{tpu_custom_call.1} parent=20 // pred_fallthru
            _
          // Predicated region
          $region92: #{tpu_custom_call.1} parent=20 // pred_check
            _
          $region93: #{tpu_custom_call.1} parent=20 // pred_check_branch
            %234 = sbr.rel (0) target = $region95
          $region94: #{tpu_custom_call.1} parent=20 // pred_region
            %235 = vsyncadd [#allocation3], 16
          $region95: #{tpu_custom_call.1} parent=20 // pred_fallthru
            _
          %s236 = sld [smem:[#allocation11 + %s109]]
          %s237 = scalar_lea.hbm %s6, %s236
          %s238 = sadd.s32 %s104, 40
          %s239 = scalar_lea.vmem [#allocation2], %s238
          // Predicated region
          $region96: #{tpu_custom_call.1} parent=20 // pred_check
            _
          $region97: #{tpu_custom_call.1} parent=20 // pred_check_branch
            %241 = sbr.rel target = $region99
          $region98: #{tpu_custom_call.1} parent=20 // pred_region
            %242 = sst [smem:[#allocation14]] [#allocation23]
            %243 = sst [smem:[#allocation15]] [#allocation22]
          $region99: #{tpu_custom_call.1} parent=20 // pred_fallthru
            _
          %245 = shalt.err (0)
          %s247 = sshll.u32 %s237, 4
          %s248 = int_to_ptr.hbm [resolvable:$true] %s247
          %s249 = sshll.u32 %s239, 4
          %s250 = int_to_ptr.vmem [resolvable:$true] %s249
          %252 = dma.hbm_to_vmem [thread:$0]  %s248, 16, %s250, [#allocation3]
        $region21: #{tpu_custom_call.1} parent=15 // loop_footer
          %s108 = sadd.s32 1, %s104
        $region22: #{tpu_custom_call.1} parent=15 // loop_footer_branch
          %103 = sbr.rel target = $region18
        $region23: #{tpu_custom_call.1} parent=15 // loop_exit
          _
      $region16: #{tpu_custom_call.1} parent=11 // pred_fallthru
        _
      %p253 = scmp.lt.s32.totalorder %s54, 0
      %s254 = ssub.s32 0, %s54
      %s255 = scalar_select %p253, %s254, %s54
      %s256 = sand.u32 %s255, 1
      %s257 = ssub.s32 0, %s256
      %s258 = scalar_select %p253, %s257, %s256
      %p259 = scmp.ne.s32.totalorder %s258, 0
      %p260 = scmp.lt.s32.totalorder %s258, 0
      %p261 = pnand %p260, %p259
      %p262 = pneg %p261
      %s263 = sadd.s32 %s258, 2
      %s264 = scalar_select %p262, %s263, %s258
      %s265 = scalar_lea.sflag [#allocation3], %s264
      %s266 = smul.u32 6, 8
      %s267 = smul.u32 %s266, 1
      %s268 = sshll.u32 %s267, 4
      %269 = dma.done %s265, %s268
      %s270 = sadd.s32 %s54, 1
      %p271 = scmp.lt.s32.totalorder %s270, 1
      // Predicated region
      $region100: #{tpu_custom_call.1} parent=11 // pred_check
        %p272 = pneg %p271
      $region101: #{tpu_custom_call.1} parent=11 // pred_check_branch
        %274 = sbr.rel (%p272) target = $region103
      $region102: #{tpu_custom_call.1} parent=11 // pred_region
        %s275 = sadd.s32 %s95, 1
        %s276 = ssub.s32 1, %s264
        %s277 = smul.u32 %s275, 8
        loop: start=0, step=1, limit=8
        $region104: #{tpu_custom_call.1} parent=102 // loop_pre_header
          _
        $region105: #{tpu_custom_call.1} parent=102 // loop_header
          %s279 = sphi 0, %s283
          %p280 = scmp.ge.s32.totalorder %s279, 8
        $region106: #{tpu_custom_call.1} parent=102 // loop_header_branch
          %282 = sbr.rel (%p280) target = $region110
        $region107: #{tpu_custom_call.1} parent=102 // loop_body
          %s284 = sadd.s32 %s277, %s279
          %s285 = sld [smem:[#allocation6 + %s284]]
          %s286 = scalar_lea.hbm %s6, %s285
          %s287 = smul.u32 %s276, 48
          %s288 = sadd.s32 %s279, %s287
          %s289 = scalar_lea.vmem [#allocation2], %s288
          %s290 = scalar_lea.sflag [#allocation3], %s276
          // Predicated region
          $region111: #{tpu_custom_call.1} parent=107 // pred_check
            _
          $region112: #{tpu_custom_call.1} parent=107 // pred_check_branch
            %292 = sbr.rel target = $region114
          $region113: #{tpu_custom_call.1} parent=107 // pred_region
            %293 = sst [smem:[#allocation14]] [#allocation25]
            %294 = sst [smem:[#allocation15]] [#allocation24]
          $region114: #{tpu_custom_call.1} parent=107 // pred_fallthru
            _
          %296 = shalt.err (0)
          %s298 = sshll.u32 %s286, 4
          %s299 = int_to_ptr.hbm [resolvable:$true] %s298
          %s300 = sshll.u32 %s289, 4
          %s301 = int_to_ptr.vmem [resolvable:$true] %s300
          %303 = dma.hbm_to_vmem [thread:$0]  %s299, 16, %s301, %s290
          %s304 = sld [smem:[#allocation7 + %s284]]
          %s305 = scalar_lea.vmem %s7, %s304
          %s306 = sadd.s32 %s279, 8
          %s307 = sadd.s32 %s306, %s287
          %s308 = scalar_lea.vmem [#allocation2], %s307
          // Predicated region
          $region115: #{tpu_custom_call.1} parent=107 // pred_check
            _
          $region116: #{tpu_custom_call.1} parent=107 // pred_check_branch
            %310 = sbr.rel target = $region118
          $region117: #{tpu_custom_call.1} parent=107 // pred_region
            // Predicated region
            $region130: #{tpu_custom_call.1} parent=117 // pred_check
              _
            $region131: #{tpu_custom_call.1} parent=117 // pred_check_branch
              %326 = sbr.rel (0) target = $region133
            $region132: #{tpu_custom_call.1} parent=117 // pred_region
              %s328 = ssub.s32 2, 1
              loop: start=0, step=1, limit=1
              $region134: #{tpu_custom_call.1} parent=132 // loop_pre_header
                _
              $region135: #{tpu_custom_call.1} parent=132 // loop_header
                %s330 = sphi 0, %s334
                %p331 = scmp.ge.s32.totalorder %s330, 1
                %s335 = sphi %s305, %s305
                %s336 = sphi %s308, %s308
              $region136: #{tpu_custom_call.1} parent=132 // loop_header_branch
                %333 = sbr.rel (%p331) target = $region140
              $region137: #{tpu_custom_call.1} parent=132 // loop_body
                %v337 = vld [vmem:[%s335] sm:%s328]
                %338 = vst [vmem:[%s336] sm:%s328] %v337
              $region138: #{tpu_custom_call.1} parent=132 // loop_footer
                %s334 = sadd.s32 1, %s330
              $region139: #{tpu_custom_call.1} parent=132 // loop_footer_branch
                %329 = sbr.rel target = $region135
              $region140: #{tpu_custom_call.1} parent=132 // loop_exit
                _
            $region133: #{tpu_custom_call.1} parent=117 // pred_fallthru
              _
          $region118: #{tpu_custom_call.1} parent=107 // pred_fallthru
            _
          // Predicated region
          $region119: #{tpu_custom_call.1} parent=107 // pred_check
            _
          $region120: #{tpu_custom_call.1} parent=107 // pred_check_branch
            %312 = sbr.rel (0) target = $region122
          $region121: #{tpu_custom_call.1} parent=107 // pred_region
            %s314 = ssub.s32 2, 1
            loop: start=0, step=1, limit=1
            $region123: #{tpu_custom_call.1} parent=121 // loop_pre_header
              _
            $region124: #{tpu_custom_call.1} parent=121 // loop_header
              %s316 = sphi 0, %s320
              %p317 = scmp.ge.s32.totalorder %s316, 1
              %s321 = sphi %s305, %s305
              %s322 = sphi %s308, %s308
            $region125: #{tpu_custom_call.1} parent=121 // loop_header_branch
              %319 = sbr.rel (%p317) target = $region129
            $region126: #{tpu_custom_call.1} parent=121 // loop_body
              %v323 = vld [vmem:[%s321] sm:%s314]
              %324 = vst [vmem:[%s322] sm:%s314] %v323
            $region127: #{tpu_custom_call.1} parent=121 // loop_footer
              %s320 = sadd.s32 1, %s316
            $region128: #{tpu_custom_call.1} parent=121 // loop_footer_branch
              %315 = sbr.rel target = $region124
            $region129: #{tpu_custom_call.1} parent=121 // loop_exit
              _
          $region122: #{tpu_custom_call.1} parent=107 // pred_fallthru
            _
          // Predicated region
          $region141: #{tpu_custom_call.1} parent=107 // pred_check
            _
          $region142: #{tpu_custom_call.1} parent=107 // pred_check_branch
            %341 = sbr.rel (0) target = $region144
          $region143: #{tpu_custom_call.1} parent=107 // pred_region
            %342 = vsyncadd %s290, 16
          $region144: #{tpu_custom_call.1} parent=107 // pred_fallthru
            _
          %s343 = sld [smem:[#allocation8 + %s284]]
          %s344 = scalar_lea.hbm %s6, %s343
          %s345 = sadd.s32 %s279, 16
          %s346 = sadd.s32 %s345, %s287
          %s347 = scalar_lea.vmem [#allocation2], %s346
          // Predicated region
          $region145: #{tpu_custom_call.1} parent=107 // pred_check
            _
          $region146: #{tpu_custom_call.1} parent=107 // pred_check_branch
            %349 = sbr.rel target = $region148
          $region147: #{tpu_custom_call.1} parent=107 // pred_region
            %350 = sst [smem:[#allocation14]] [#allocation28]
            %351 = sst [smem:[#allocation15]] [#allocation27]
          $region148: #{tpu_custom_call.1} parent=107 // pred_fallthru
            _
          %353 = shalt.err (0)
          %s355 = sshll.u32 %s344, 4
          %s356 = int_to_ptr.hbm [resolvable:$true] %s355
          %s357 = sshll.u32 %s347, 4
          %s358 = int_to_ptr.vmem [resolvable:$true] %s357
          %360 = dma.hbm_to_vmem [thread:$0]  %s356, 16, %s358, %s290
          %s361 = sld [smem:[#allocation9 + %s284]]
          %s362 = scalar_lea.hbm %s6, %s361
          %s363 = sadd.s32 %s279, 24
          %s364 = sadd.s32 %s363, %s287
          %s365 = scalar_lea.vmem [#allocation2], %s364
          // Predicated region
          $region149: #{tpu_custom_call.1} parent=107 // pred_check
            _
          $region150: #{tpu_custom_call.1} parent=107 // pred_check_branch
            %367 = sbr.rel target = $region152
          $region151: #{tpu_custom_call.1} parent=107 // pred_region
            %368 = sst [smem:[#allocation14]] [#allocation30]
            %369 = sst [smem:[#allocation15]] [#allocation29]
          $region152: #{tpu_custom_call.1} parent=107 // pred_fallthru
            _
          %371 = shalt.err (0)
          %s373 = sshll.u32 %s362, 4
          %s374 = int_to_ptr.hbm [resolvable:$true] %s373
          %s375 = sshll.u32 %s365, 4
          %s376 = int_to_ptr.vmem [resolvable:$true] %s375
          %378 = dma.hbm_to_vmem [thread:$0]  %s374, 16, %s376, %s290
          %s379 = sld [smem:[#allocation10 + %s284]]
          %s380 = scalar_lea.vmem %s7, %s379
          %s381 = sadd.s32 %s279, 32
          %s382 = sadd.s32 %s381, %s287
          %s383 = scalar_lea.vmem [#allocation2], %s382
          // Predicated region
          $region153: #{tpu_custom_call.1} parent=107 // pred_check
            _
          $region154: #{tpu_custom_call.1} parent=107 // pred_check_branch
            %385 = sbr.rel target = $region156
          $region155: #{tpu_custom_call.1} parent=107 // pred_region
            // Predicated region
            $region168: #{tpu_custom_call.1} parent=155 // pred_check
              _
            $region169: #{tpu_custom_call.1} parent=155 // pred_check_branch
              %401 = sbr.rel (0) target = $region171
            $region170: #{tpu_custom_call.1} parent=155 // pred_region
              %s403 = ssub.s32 2, 1
              loop: start=0, step=1, limit=1
              $region172: #{tpu_custom_call.1} parent=170 // loop_pre_header
                _
              $region173: #{tpu_custom_call.1} parent=170 // loop_header
                %s405 = sphi 0, %s409
                %p406 = scmp.ge.s32.totalorder %s405, 1
                %s410 = sphi %s380, %s380
                %s411 = sphi %s383, %s383
              $region174: #{tpu_custom_call.1} parent=170 // loop_header_branch
                %408 = sbr.rel (%p406) target = $region178
              $region175: #{tpu_custom_call.1} parent=170 // loop_body
                %v412 = vld [vmem:[%s410] sm:%s403]
                %413 = vst [vmem:[%s411] sm:%s403] %v412
              $region176: #{tpu_custom_call.1} parent=170 // loop_footer
                %s409 = sadd.s32 1, %s405
              $region177: #{tpu_custom_call.1} parent=170 // loop_footer_branch
                %404 = sbr.rel target = $region173
              $region178: #{tpu_custom_call.1} parent=170 // loop_exit
                _
            $region171: #{tpu_custom_call.1} parent=155 // pred_fallthru
              _
          $region156: #{tpu_custom_call.1} parent=107 // pred_fallthru
            _
          // Predicated region
          $region157: #{tpu_custom_call.1} parent=107 // pred_check
            _
          $region158: #{tpu_custom_call.1} parent=107 // pred_check_branch
            %387 = sbr.rel (0) target = $region160
          $region159: #{tpu_custom_call.1} parent=107 // pred_region
            %s389 = ssub.s32 2, 1
            loop: start=0, step=1, limit=1
            $region161: #{tpu_custom_call.1} parent=159 // loop_pre_header
              _
            $region162: #{tpu_custom_call.1} parent=159 // loop_header
              %s391 = sphi 0, %s395
              %p392 = scmp.ge.s32.totalorder %s391, 1
              %s396 = sphi %s380, %s380
              %s397 = sphi %s383, %s383
            $region163: #{tpu_custom_call.1} parent=159 // loop_header_branch
              %394 = sbr.rel (%p392) target = $region167
            $region164: #{tpu_custom_call.1} parent=159 // loop_body
              %v398 = vld [vmem:[%s396] sm:%s389]
              %399 = vst [vmem:[%s397] sm:%s389] %v398
            $region165: #{tpu_custom_call.1} parent=159 // loop_footer
              %s395 = sadd.s32 1, %s391
            $region166: #{tpu_custom_call.1} parent=159 // loop_footer_branch
              %390 = sbr.rel target = $region162
            $region167: #{tpu_custom_call.1} parent=159 // loop_exit
              _
          $region160: #{tpu_custom_call.1} parent=107 // pred_fallthru
            _
          // Predicated region
          $region179: #{tpu_custom_call.1} parent=107 // pred_check
            _
          $region180: #{tpu_custom_call.1} parent=107 // pred_check_branch
            %416 = sbr.rel (0) target = $region182
          $region181: #{tpu_custom_call.1} parent=107 // pred_region
            %417 = vsyncadd %s290, 16
          $region182: #{tpu_custom_call.1} parent=107 // pred_fallthru
            _
          %s418 = sld [smem:[#allocation11 + %s284]]
          %s419 = scalar_lea.hbm %s6, %s418
          %s420 = sadd.s32 %s279, 40
          %s421 = sadd.s32 %s420, %s287
          %s422 = scalar_lea.vmem [#allocation2], %s421
          // Predicated region
          $region183: #{tpu_custom_call.1} parent=107 // pred_check
            _
          $region184: #{tpu_custom_call.1} parent=107 // pred_check_branch
            %424 = sbr.rel target = $region186
          $region185: #{tpu_custom_call.1} parent=107 // pred_region
            %425 = sst [smem:[#allocation14]] [#allocation33]
            %426 = sst [smem:[#allocation15]] [#allocation32]
          $region186: #{tpu_custom_call.1} parent=107 // pred_fallthru
            _
          %428 = shalt.err (0)
          %s430 = sshll.u32 %s419, 4
          %s431 = int_to_ptr.hbm [resolvable:$true] %s430
          %s432 = sshll.u32 %s422, 4
          %s433 = int_to_ptr.vmem [resolvable:$true] %s432
          %435 = dma.hbm_to_vmem [thread:$0]  %s431, 16, %s433, %s290
        $region108: #{tpu_custom_call.1} parent=102 // loop_footer
          %s283 = sadd.s32 1, %s279
        $region109: #{tpu_custom_call.1} parent=102 // loop_footer_branch
          %278 = sbr.rel target = $region105
        $region110: #{tpu_custom_call.1} parent=102 // loop_exit
          _
      $region103: #{tpu_custom_call.1} parent=11 // pred_fallthru
        _
      %s436 = smul.u32 %s264, 48
      %s437 = scalar_lea.vmem [#allocation2], %s436
      %v438 = vld [vmem:[%s437] sm:$0xff]
      %s439 = sadd.s32 8, %s436
      %s440 = scalar_lea.vmem [#allocation2], %s439
      %v441 = vld [vmem:[%s440] sm:$0xff]
      %s442 = sadd.s32 16, %s436
      %s443 = scalar_lea.vmem [#allocation2], %s442
      %v444 = vld [vmem:[%s443] sm:$0xff]
      %s445 = sadd.s32 24, %s436
      %s446 = scalar_lea.vmem [#allocation2], %s445
      %v447 = vld [vmem:[%s446] sm:$0xff]
      %s448 = sadd.s32 32, %s436
      %s449 = scalar_lea.vmem [#allocation2], %s448
      %v450 = vld [vmem:[%s449] sm:$0xff]
      %s451 = sadd.s32 40, %s436
      %s452 = scalar_lea.vmem [#allocation2], %s451
      %v453 = vld [vmem:[%s452] sm:$0xff]
      %v454 = vmul.f32 %v438, %v438
      %455 = vadd.xlane.f32.xlu0 %v454
      %v456 = vpop.xlane.xlu0 %455
      %v457 = vrsqrt.pop %v456
      %v458 = vmul.f32 %v457, %v456
      %v459 = vmul.f32 %v458, %v457
      %v460 = vmul.f32 0.5, %v459
      %v461 = vsub.f32 1.5, %v460
      %v462 = vmul.f32 %v457, %v461
      %vm463 = vweird.f32 %v456
      %vm464 = vweird.f32 %v457
      %vm465 = vmor %vm463, %vm464
      %v466 = vsel %vm465, %v457, %v462
      %v467 = vmul.f32 %v438, %v466
      %v468 = vmul.f32 %v444, %v444
      %469 = vadd.xlane.f32.xlu0 %v468
      %v470 = vpop.xlane.xlu0 %469
      %v471 = vrsqrt.pop %v470
      %v472 = vmul.f32 %v471, %v470
      %v473 = vmul.f32 %v472, %v471
      %v474 = vmul.f32 0.5, %v473
      %v475 = vsub.f32 1.5, %v474
      %v476 = vmul.f32 %v471, %v475
      %vm477 = vweird.f32 %v470
      %vm478 = vweird.f32 %v471
      %vm479 = vmor %vm477, %vm478
      %v480 = vsel %vm479, %v471, %v476
      %v481 = vmul.f32 %v444, %v480
      %v482 = vadd.f32 %v467, %v441
      %v483 = vsub.f32 %v482, %v481
      %v484 = vand.u32 2147483647, %v483
      %485 = vadd.xlane.f32.xlu0 %v484
      %v486 = vpop.xlane.xlu0 %485
      %v487 = vmul.f32 %v447, %v447
      %488 = vadd.xlane.f32.xlu0 %v487
      %v489 = vpop.xlane.xlu0 %488
      %v490 = vrsqrt.pop %v489
      %v491 = vmul.f32 %v490, %v489
      %v492 = vmul.f32 %v491, %v490
      %v493 = vmul.f32 0.5, %v492
      %v494 = vsub.f32 1.5, %v493
      %v495 = vmul.f32 %v490, %v494
      %vm496 = vweird.f32 %v489
      %vm497 = vweird.f32 %v490
      %vm498 = vmor %vm496, %vm497
      %v499 = vsel %vm498, %v490, %v495
      %v500 = vmul.f32 %v447, %v499
      %v501 = vmul.f32 %v453, %v453
      %502 = vadd.xlane.f32.xlu0 %v501
      %v503 = vpop.xlane.xlu0 %502
      %v504 = vrsqrt.pop %v503
      %v505 = vmul.f32 %v504, %v503
      %v506 = vmul.f32 %v505, %v504
      %v507 = vmul.f32 0.5, %v506
      %v508 = vsub.f32 1.5, %v507
      %v509 = vmul.f32 %v504, %v508
      %vm510 = vweird.f32 %v503
      %vm511 = vweird.f32 %v504
      %vm512 = vmor %vm510, %vm511
      %v513 = vsel %vm512, %v504, %v509
      %v514 = vmul.f32 %v453, %v513
      %v515 = vadd.f32 %v500, %v450
      %v516 = vsub.f32 %v515, %v514
      %v517 = vand.u32 2147483647, %v516
      %518 = vadd.xlane.f32.xlu0 %v517
      %v519 = vpop.xlane.xlu0 %518
      %v520 = vsub.f32 %v486, %v519
      %v521 = vadd.f32 %v520, 1.0
      %v522 = vmax.f32 %v521, 0.0
      %s523 = smul.u32 %s95, 8
      %v524 = vlaneseq
      %v525 = vshrl.u32 %v524, 7
      %v526 = vstv %s523
      %v527 = vadd.s32 %v526, %v525
      %vm528 = vcmp.lt.s32.totalorder %v527, 8
      %v529 = vsel %vm528, %v522, 0.0
      %v530 = vld [vmem:[#allocation4] sm:$0xff]
      %v531 = vadd.f32 %v530, %v529
      %vm532 = vcmask 7168
      %533 = vst.msk [vmem:[#allocation4] sm:$0xff] %vm532, %v531
      // Predicated region
      $region187: #{tpu_custom_call.1} parent=11 // pred_check
        %p534 = pneg %p96
      $region188: #{tpu_custom_call.1} parent=11 // pred_check_branch
        %536 = sbr.rel (%p534) target = $region190
      $region189: #{tpu_custom_call.1} parent=11 // pred_region
        %v537 = vld [vmem:[#allocation4] sm:$0xff]
        %v538 = vsel %vm532, %v537, 0.0
        %539 = vadd.xlane.f32.xlu0 %v538
        %v540 = vpop.xlane.xlu0 %539
        %v541 = vrot.slane %v540, 4
        %v542 = vadd.f32 %v540, %v541
        %v543 = vrot.slane %v542, 2
        %v544 = vadd.f32 %v542, %v543
        %v545 = vrot.slane %v544, 1
        %v546 = vadd.f32 %v544, %v545
        %s547 = vtos %v546
        %v548 = vstv %s547
        %vm549 = vcmask 0
        %550 = vst.msk [vmem:[%s94] sm:$0x1] %vm549, %v548
      $region190: #{tpu_custom_call.1} parent=11 // pred_fallthru
        _
      %p551 = scmp.lt.s32.totalorder %s53, 1
      %s552 = scalar_select %p551, %s53, 1
      %s553 = scalar_lea.vmem %s8, %s552
      // Predicated region
      $region191: #{tpu_custom_call.1} parent=11 // pred_check
        %p554 = pneg %p72
      $region192: #{tpu_custom_call.1} parent=11 // pred_check_branch
        %556 = sbr.rel (%p554) target = $region194
      $region193: #{tpu_custom_call.1} parent=11 // pred_region
        _
      $region194: #{tpu_custom_call.1} parent=11 // pred_fallthru
        _
    $region12: #{tpu_custom_call.1} parent=5 // pred_fallthru
      _
    %p557 = scmp.le.s32.totalorder 1, %s47
    // Predicated region
    $region195: #{tpu_custom_call.1} parent=5 // pred_check
      %p558 = pneg %p557
    $region196: #{tpu_custom_call.1} parent=5 // pred_check_branch
      %560 = sbr.rel (%p558) target = $region198
    $region197: #{tpu_custom_call.1} parent=5 // pred_region
      %s561 = ssub.s32 %s47, 1
      // Predicated region
      $region199: #{tpu_custom_call.1} parent=197 // pred_check
        %p562 = pneg %p78
      $region200: #{tpu_custom_call.1} parent=197 // pred_check_branch
        %564 = sbr.rel (%p562) target = $region202
      $region201: #{tpu_custom_call.1} parent=197 // pred_region
        %p565 = scmp.lt.s32.totalorder %s55, 1
        %s566 = scalar_select %p565, %s55, 1
        %s567 = scalar_lea.vmem %s8, %s566
      $region202: #{tpu_custom_call.1} parent=197 // pred_fallthru
        _
    $region198: #{tpu_custom_call.1} parent=5 // pred_fallthru
      _
  $region6: #{tpu_custom_call.1} parent=0 // loop_footer
    %s51 = sadd.s32 1, %s47
  $region7: #{tpu_custom_call.1} parent=0 // loop_footer_branch
    %46 = sbr.rel target = $region3
  $region8: #{tpu_custom_call.1} parent=0 // loop_exit
    _
  %568 = vsyncmov [#allocation3]
  %s569 = vpop.sfrf %568
  %p570 = scmp.eq.s32.totalorder %s569, 0
  %p571 = pneg %p570
  %573 = shalt.err (%p571)
  %s574 = scalar_lea.sflag [#allocation3], 1
  %575 = vsyncmov %s574
  %s576 = vpop.sfrf %575
  %p577 = scmp.eq.s32.totalorder %s576, 0
  %p578 = pneg %p577
  %580 = shalt.err (%p578)

</llo_original>
